<compile_context>
chip_gen: v7x
topology: tpu7x:2x2x1
jax: 0.10.0
libtpu: 0.0.40
codegen_flags: <defaults>
</compile_context>

<pallas_src>
import math

import jax
import jax.numpy as jnp
from jax import lax
from jax.experimental import pallas as pl
from jax.experimental.pallas import tpu as pltpu


def _sdpa_kernel(q_ref, k_ref, v_ref, sb_ref, out_ref, attn_ref):
    # q_ref: (hb, tq, dk), k_ref: (hb, lk, dk), v_ref: (hb, lk, dv)
    # sb_ref: (tq, 2) f32 packed per-query-row [scale (1/T or 0), bias (0 or -1e9)]
    q = q_ref[...]
    k = k_ref[...]

    # scores: (hb, tq, lk) -- contract the last dims of q and k directly (no explicit
    # transpose), native-dtype operands on the MXU, f32 accumulation.
    scores = lax.dot_general(
        q, k,
        dimension_numbers=(((2,), (2,)), ((0,), (0,))),
        preferred_element_type=jnp.float32,
    )

    # temperature + row mask folded into one FMA: masked rows become exactly -1e9
    # (matching torch.masked_fill), unmasked rows become scores / temperature.
    sb = sb_ref[...]                       # (tq, 2)
    scale = sb[:, 0:1]                     # (tq, 1)
    bias = sb[:, 1:2]                      # (tq, 1)
    scores = scores * scale[None, :, :] + bias[None, :, :]

    # softmax over the key axis, in f32
    s_max = jnp.max(scores, axis=-1, keepdims=True)
    e = jnp.exp(scores - s_max)
    denom = jnp.sum(e, axis=-1, keepdims=True)
    inv = pl.reciprocal(denom, approx=True)        # EUP slot
    inv = inv * (2.0 - denom * inv)                # one Newton step -> ~f32-exact

    # Cast the probabilities ONCE; reuse for both the attn store and the second matmul.
    p = (e * inv).astype(v_ref.dtype)
    attn_ref[...] = p.astype(attn_ref.dtype)       # no-op cast when attn dtype == v dtype
    out_ref[...] = lax.dot_general(
        p, v_ref[...],
        dimension_numbers=(((2,), (1,)), ((0,), (0,))),
        preferred_element_type=jnp.float32,
    ).astype(out_ref.dtype)


def _divisors_desc(n):
    return sorted(
        {d for i in range(1, int(math.isqrt(n)) + 1) if n % i == 0 for d in (i, n // i)},
        reverse=True,
    )


def _vmem_capacity_bytes():
    """Physical VMEM bytes per TensorCore, with a conservative (v7x-sized) fallback."""
    try:
        info = pltpu.get_tpu_info()
        cap = getattr(info, "vmem_capacity_bytes", None)
        if cap:
            return int(cap)
    except Exception:
        pass
    return 64 * 1024 * 1024  # conservative: v7x per-TC size; safe on all generations


def scaled_dot_product_attention(q, k, v, temperature, mask=None, *,
                                 block_q=256, attn_dtype=None):
    """q: (B, n, lq, dk), k: (B, n, lk, dk), v: (B, n, lk, dv), mask: (B, lq) or None."""
    B, n, lq, dk = q.shape
    lk = k.shape[2]
    dv = v.shape[3]
    attn_dtype = jnp.dtype(attn_dtype) if attn_dtype is not None else jnp.dtype(q.dtype)
    in_size = jnp.dtype(q.dtype).itemsize
    out_size = jnp.dtype(q.dtype).itemsize
    attn_size = attn_dtype.itemsize

    # Per-query-row (scale, bias), packed into one (B, lq, 2) stream (single DMA per step,
    # instead of two (tq,1) tiles that each pad to 128 lanes).
    inv_t = jnp.float32(1.0 / float(temperature))
    if mask is None:
        keep = jnp.ones((B, lq), dtype=jnp.float32)
    else:
        keep = (mask != 0).astype(jnp.float32)
    scale = keep * inv_t
    bias = (1.0 - keep) * jnp.float32(-1e9)
    sb = jnp.stack([scale, bias], axis=-1)          # (B, lq, 2) f32

    # ---- per-generation VMEM budget with honest per-step accounting ----
    vmem_cap = _vmem_capacity_bytes()
    # ~96 MiB on v5e/v6e (128 MiB physical), ~48 MiB on v7x (64 MiB/TC).
    vmem_limit = min(max((vmem_cap * 3) // 4, 32 * 1024 * 1024), 100 * 1024 * 1024)
    budget = int(vmem_limit * 0.8)                  # headroom for compiler scratch

    # tq: sublane-aligned divisor of lq (8 for 4B dtypes, 16 for 2B), else full extent.
    sublane = {4: 8, 2: 16, 1: 32}.get(in_size, 8)
    tq_cands = [d for d in _divisors_desc(lq) if d <= block_q and d % sublane == 0]
    if not tq_cands:
        tq_cands = [lq]   # full-extent block always satisfies the tiling constraint

    def per_step_bytes(hb, tq):
        dbuf = 2  # every pipelined stream is double-buffered (K/V included — conservative)
        io = dbuf * (hb * tq * dk * in_size        # q
                     + hb * lk * dk * in_size      # k
                     + hb * lk * dv * in_size      # v
                     + tq * 128 * 4                # (tq, 2) scale/bias, lane-padded f32
                     + hb * tq * dv * out_size     # output
                     + hb * tq * lk * attn_size)   # attn writeback
        interm = 3 * hb * tq * lk * 4              # f32 scores, e, probs (upper bound)
        return io + interm

    tq, hb = tq_cands[-1], 1
    found = False
    for tq_c in tq_cands:                          # prefer the largest tq that fits
        for hb_c in _divisors_desc(n):             # then the largest heads-per-block
            if per_step_bytes(hb_c, tq_c) <= budget:
                tq, hb = tq_c, hb_c
                found = True
                break
        if found:
            break

    # v7x megacore: make sure the two leading "parallel" axes expose >= 2 work units.
    if B * (n // hb) < 2 and n > 1:
        hb = max(d for d in _divisors_desc(n) if d <= n // 2)

    sq = pl.Squeezed()
    grid = (B, n // hb, lq // tq)

    out, attn = pl.pallas_call(
        _sdpa_kernel,
        out_shape=(
            jax.ShapeDtypeStruct((B, n, lq, dv), q.dtype),
            jax.ShapeDtypeStruct((B, n, lq, lk), attn_dtype),
        ),
        grid_spec=pltpu.PrefetchScalarGridSpec(
            num_scalar_prefetch=0,
            grid=grid,
            in_specs=[
                pl.BlockSpec((sq, hb, tq, dk), lambda b, h, i: (b, h, i, 0)),  # q
                pl.BlockSpec((sq, hb, lk, dk), lambda b, h, i: (b, h, 0, 0)),  # k (resident over i)
                pl.BlockSpec((sq, hb, lk, dv), lambda b, h, i: (b, h, 0, 0)),  # v (resident over i)
                pl.BlockSpec((sq, tq, 2),      lambda b, h, i: (b, i, 0)),     # packed scale/bias
            ],
            out_specs=[
                pl.BlockSpec((sq, hb, tq, dv), lambda b, h, i: (b, h, i, 0)),  # output
                pl.BlockSpec((sq, hb, tq, lk), lambda b, h, i: (b, h, i, 0)),  # attn
            ],
        ),
        compiler_params=pltpu.CompilerParams(
            # B / head axes parallel (megacore sharding); q-tile axis arbitrary so the
            # K/V blocks stay resident per (b, h) on each core.
            dimension_semantics=("parallel", "parallel", "arbitrary"),
            vmem_limit_bytes=vmem_limit,
        ),
    )(q, k, v, sb)
    return out, attn


def _reference(q, k, v, temperature, mask=None):
    # Same math as the PyTorch module; the temperature is applied after the matmul,
    # which is mathematically identical to (q / T) @ k^T.
    attn = jnp.einsum("bnqd,bnkd->bnqk", q, k) * (1.0 / temperature)
    if mask is not None:
        m = mask.reshape(mask.shape[0], 1, mask.shape[1], 1)
        attn = jnp.where(m == 0, -1e9, attn)
    attn = jax.nn.softmax(attn, axis=-1)
    out = jnp.einsum("bnqk,bnkd->bnqd", attn, v)
    return out, attn


if __name__ == "__main__":
    B, n_head, lq, lk, dk, dv = 2, 4, 8, 8, 32, 32
    temperature = dk ** 0.5

    key = jax.random.PRNGKey(0)
    kq, kk, kv, km = jax.random.split(key, 4)
    q = jax.random.normal(kq, (B, n_head, lq, dk), dtype=jnp.float32)
    k = jax.random.normal(kk, (B, n_head, lk, dk), dtype=jnp.float32)
    v = jax.random.normal(kv, (B, n_head, lk, dv), dtype=jnp.float32)
    # row mask: zero out last 2 query rows of batch 1
    mask = jnp.ones((B, lq), dtype=jnp.float32).at[1, -2:].set(0.0)

    out, attn = scaled_dot_product_attention(q, k, v, temperature, mask)
    out = jax.block_until_ready(out)
    attn = jax.block_until_ready(attn)

    out_ref, attn_ref = _reference(q, k, v, temperature, mask)
    assert out.shape == (B, n_head, lq, dv)
    assert attn.shape == (B, n_head, lq, lk)
    assert jnp.allclose(out, out_ref, atol=1e-5, rtol=1e-5)
    assert jnp.allclose(attn, attn_ref, atol=1e-5, rtol=1e-5)

    # also exercise the mask=None path
    out2, attn2 = scaled_dot_product_attention(q, k, v, temperature, None)
    out2 = jax.block_until_ready(out2)
    attn2 = jax.block_until_ready(attn2)
    out2_ref, attn2_ref = _reference(q, k, v, temperature, None)
    assert jnp.allclose(out2, out2_ref, atol=1e-5, rtol=1e-5)
    assert jnp.allclose(attn2, attn2_ref, atol=1e-5, rtol=1e-5)

    print("KERNEL_OK")
</pallas_src>

<mosaic_0001>
module attributes {stable_mosaic.version = 11 : i64} {
  func.func @_sdpa_kernel(%arg0: i32, %arg1: i32, %arg2: i32, %arg3: memref<1x4x8x32xf32, #tpu.memory_space<vmem>>, %arg4: memref<1x4x8x32xf32, #tpu.memory_space<vmem>>, %arg5: memref<1x4x8x32xf32, #tpu.memory_space<vmem>>, %arg6: memref<1x8x2xf32, #tpu.memory_space<vmem>>, %arg7: memref<1x4x8x32xf32, #tpu.memory_space<vmem>>, %arg8: memref<1x4x8x8xf32, #tpu.memory_space<vmem>>) attributes {dimension_semantics = [#tpu.dimension_semantics<parallel>, #tpu.dimension_semantics<parallel>, #tpu.dimension_semantics<arbitrary>], iteration_bounds = array<i64: 2, 1, 1>, scalar_prefetch = 0 : i64, scratch_operands = 0 : i64, tpu.core_type = #tpu.core_type<tc>, window_params = [{transform_indices = @transform_0, window_bounds = array<i64: 1, 4, 8, 32>}, {transform_indices = @transform_1, window_bounds = array<i64: 1, 4, 8, 32>}, {transform_indices = @transform_2, window_bounds = array<i64: 1, 4, 8, 32>}, {transform_indices = @transform_3, window_bounds = array<i64: 1, 8, 2>}, {transform_indices = @transform_4, window_bounds = array<i64: 1, 4, 8, 32>}, {transform_indices = @transform_5, window_bounds = array<i64: 1, 4, 8, 8>}]} {
    %c0 = arith.constant 0 : index
    %c0_0 = arith.constant 0 : index
    %c0_1 = arith.constant 0 : index
    %c0_2 = arith.constant 0 : index
    %0 = vector.load %arg3[%c0, %c0_0, %c0_1, %c0_2] : memref<1x4x8x32xf32, #tpu.memory_space<vmem>>, vector<1x4x8x32xf32>
    %1 = vector.shape_cast %0 : vector<1x4x8x32xf32> to vector<4x8x32xf32>
    %c0_3 = arith.constant 0 : index
    %c0_4 = arith.constant 0 : index
    %c0_5 = arith.constant 0 : index
    %c0_6 = arith.constant 0 : index
    %2 = vector.load %arg4[%c0_3, %c0_4, %c0_5, %c0_6] : memref<1x4x8x32xf32, #tpu.memory_space<vmem>>, vector<1x4x8x32xf32>
    %3 = vector.shape_cast %2 : vector<1x4x8x32xf32> to vector<4x8x32xf32>
    %cst = arith.constant dense<0.000000e+00> : vector<4x8x8xf32>
    %4 = tpu.matmul %1, %3, %cst {dimension_numbers = #tpu.dot_dimension_numbers<[2], [2], [1], [1], [0, 0, 0, 1, 1, 1], [0], [0]>} : vector<4x8x32xf32>, vector<4x8x32xf32>, vector<4x8x8xf32> -> vector<4x8x8xf32>
    %c0_7 = arith.constant 0 : index
    %c0_8 = arith.constant 0 : index
    %c0_9 = arith.constant 0 : index
    %5 = vector.load %arg6[%c0_7, %c0_8, %c0_9] : memref<1x8x2xf32, #tpu.memory_space<vmem>>, vector<1x8x2xf32>
    %6 = vector.shape_cast %5 : vector<1x8x2xf32> to vector<8x2xf32>
    %7 = vector.extract_strided_slice %6 {offsets = [0, 0], sizes = [8, 1], strides = [1, 1]} : vector<8x2xf32> to vector<8x1xf32>
    %8 = vector.extract_strided_slice %6 {offsets = [0, 1], sizes = [8, 1], strides = [1, 1]} : vector<8x2xf32> to vector<8x1xf32>
    %9 = vector.shape_cast %7 : vector<8x1xf32> to vector<1x8x1xf32>
    %10 = vector.broadcast %9 : vector<1x8x1xf32> to vector<4x8x8xf32>
    %11 = arith.mulf %4, %10 : vector<4x8x8xf32>
    %12 = vector.shape_cast %8 : vector<8x1xf32> to vector<1x8x1xf32>
    %13 = vector.broadcast %12 : vector<1x8x1xf32> to vector<4x8x8xf32>
    %14 = arith.addf %11, %13 : vector<4x8x8xf32>
    %cst_10 = arith.constant dense<0xFF800000> : vector<4x8xf32>
    %15 = vector.multi_reduction <maximumf>, %14, %cst_10 [2] : vector<4x8x8xf32> to vector<4x8xf32>
    %16 = vector.shape_cast %15 : vector<4x8xf32> to vector<4x8x1xf32>
    %17 = vector.broadcast %16 : vector<4x8x1xf32> to vector<4x8x8xf32>
    %18 = arith.subf %14, %17 : vector<4x8x8xf32>
    %19 = math.exp %18 : vector<4x8x8xf32>
    %cst_11 = arith.constant dense<0.000000e+00> : vector<4x8xf32>
    %20 = vector.multi_reduction <add>, %19, %cst_11 [2] : vector<4x8x8xf32> to vector<4x8xf32>
    %21 = vector.shape_cast %20 : vector<4x8xf32> to vector<4x8x1xf32>
    %22 = tpu.reciprocal %21 {approx = true} : vector<4x8x1xf32> -> vector<4x8x1xf32>
    %23 = arith.mulf %21, %22 : vector<4x8x1xf32>
    %cst_12 = arith.constant 2.000000e+00 : f32
    %24 = vector.broadcast %cst_12 : f32 to vector<4x8x1xf32>
    %25 = arith.subf %24, %23 : vector<4x8x1xf32>
    %26 = arith.mulf %22, %25 : vector<4x8x1xf32>
    %27 = vector.broadcast %26 : vector<4x8x1xf32> to vector<4x8x8xf32>
    %28 = arith.mulf %19, %27 : vector<4x8x8xf32>
    %c0_13 = arith.constant 0 : index
    %c0_14 = arith.constant 0 : index
    %c0_15 = arith.constant 0 : index
    %c0_16 = arith.constant 0 : index
    %29 = vector.load %arg8[%c0_13, %c0_14, %c0_15, %c0_16] : memref<1x4x8x8xf32, #tpu.memory_space<vmem>>, vector<1x4x8x8xf32>
    %30 = vector.shape_cast %29 : vector<1x4x8x8xf32> to vector<4x8x8xf32>
    %31 = vector.shape_cast %28 : vector<4x8x8xf32> to vector<1x4x8x8xf32>
    tpu.vector_store %arg8[%c0_13, %c0_14, %c0_15, %c0_16], %31 {strides = array<i32>} : memref<1x4x8x8xf32, #tpu.memory_space<vmem>>, vector<1x4x8x8xf32>,
    %c0_17 = arith.constant 0 : index
    %c0_18 = arith.constant 0 : index
    %c0_19 = arith.constant 0 : index
    %c0_20 = arith.constant 0 : index
    %32 = vector.load %arg5[%c0_17, %c0_18, %c0_19, %c0_20] : memref<1x4x8x32xf32, #tpu.memory_space<vmem>>, vector<1x4x8x32xf32>
    %33 = vector.shape_cast %32 : vector<1x4x8x32xf32> to vector<4x8x32xf32>
    %cst_21 = arith.constant dense<0.000000e+00> : vector<4x8x32xf32>
    %34 = tpu.matmul %28, %33, %cst_21 {dimension_numbers = #tpu.dot_dimension_numbers<[2], [1], [1], [2], [0, 0, 0, 1, 1, 2], [0], [0]>} : vector<4x8x8xf32>, vector<4x8x32xf32>, vector<4x8x32xf32> -> vector<4x8x32xf32>
    %c0_22 = arith.constant 0 : index
    %c0_23 = arith.constant 0 : index
    %c0_24 = arith.constant 0 : index
    %c0_25 = arith.constant 0 : index
    %35 = vector.load %arg7[%c0_22, %c0_23, %c0_24, %c0_25] : memref<1x4x8x32xf32, #tpu.memory_space<vmem>>, vector<1x4x8x32xf32>
    %36 = vector.shape_cast %35 : vector<1x4x8x32xf32> to vector<4x8x32xf32>
    %37 = vector.shape_cast %34 : vector<4x8x32xf32> to vector<1x4x8x32xf32>
    tpu.vector_store %arg7[%c0_22, %c0_23, %c0_24, %c0_25], %37 {strides = array<i32>} : memref<1x4x8x32xf32, #tpu.memory_space<vmem>>, vector<1x4x8x32xf32>,
    return
  }
  func.func @transform_0(%arg0: i32, %arg1: i32, %arg2: i32) -> (i32, i32, i32, i32) {
    %c0_i32 = arith.constant 0 : i32
    %c0_i32_0 = arith.constant 0 : i32
    return %arg0, %arg1, %arg2, %c0_i32 : i32, i32, i32, i32
  }
  func.func @transform_1(%arg0: i32, %arg1: i32, %arg2: i32) -> (i32, i32, i32, i32) {
    %c0_i32 = arith.constant 0 : i32
    %c0_i32_0 = arith.constant 0 : i32
    %c0_i32_1 = arith.constant 0 : i32
    return %arg0, %arg1, %c0_i32, %c0_i32_0 : i32, i32, i32, i32
  }
  func.func @transform_2(%arg0: i32, %arg1: i32, %arg2: i32) -> (i32, i32, i32, i32) {
    %c0_i32 = arith.constant 0 : i32
    %c0_i32_0 = arith.constant 0 : i32
    %c0_i32_1 = arith.constant 0 : i32
    return %arg0, %arg1, %c0_i32, %c0_i32_0 : i32, i32, i32, i32
  }
  func.func @transform_3(%arg0: i32, %arg1: i32, %arg2: i32) -> (i32, i32, i32) {
    %c0_i32 = arith.constant 0 : i32
    %c0_i32_0 = arith.constant 0 : i32
    return %arg0, %arg2, %c0_i32 : i32, i32, i32
  }
  func.func @transform_4(%arg0: i32, %arg1: i32, %arg2: i32) -> (i32, i32, i32, i32) {
    %c0_i32 = arith.constant 0 : i32
    %c0_i32_0 = arith.constant 0 : i32
    return %arg0, %arg1, %arg2, %c0_i32 : i32, i32, i32, i32
  }
  func.func @transform_5(%arg0: i32, %arg1: i32, %arg2: i32) -> (i32, i32, i32, i32) {
    %c0_i32 = arith.constant 0 : i32
    %c0_i32_0 = arith.constant 0 : i32
    return %arg0, %arg1, %arg2, %c0_i32 : i32, i32, i32, i32
  }
}

</mosaic_0001>

<llo_original>
// kernel: tpu_custom_call.1
$region0: #{tpu_custom_call.1}
  #allocation0 [shape = 'u32[]', space=smem, size = 0x4, offset = 0x4, fixed_abs, tag = 'smem constant byte address 0x4 - core index']
  #allocation1 [shape = 'u32[144,128]{1,0:T(1,128)}', space=vmem, size = 0x12000, scoped, tag = 'internal scratch']
  %s0 = inlined_call_operand.hbm [shape: f32[2,4,8,32], index: 0, kind: input, shape index: {}]
  %s1 = inlined_call_operand.hbm [shape: f32[2,4,8,32], index: 1, kind: input, shape index: {}]
  %s2 = inlined_call_operand.hbm [shape: f32[2,4,8,32], index: 2, kind: input, shape index: {}]
  %s3 = inlined_call_operand.vmem [shape: f32[2,8,2], index: 3, kind: input, shape index: {}]
  %s4 = inlined_call_operand.hbm [shape: f32[2,4,8,32], index: 4, kind: output, shape index: {0}]
  %s5 = inlined_call_operand.hbm [shape: f32[2,4,8,8], index: 5, kind: output, shape index: {1}]
  %6 = xla_tuple %s4, %s5
  %s7 = sld [smem:[#allocation0]]
  $region69: #{tpu_custom_call.1} parent=0
    _
  %s9 = ssub.s32 1, %s7
  %s10 = scalar_select 0, %s9, %s7
  $region1: #{tpu_custom_call.1} parent=0
    #allocation2 [shape = 'u8[32768]{0}', space=vmem, size = 0x8000, scoped, tag = 'input window, operand 0']
    #allocation3 [shape = 's32[2]{0}', space=sflag, size = 0x8, scoped, tag = 'scoped memory for tpu_custom_call.1']
    #allocation4 [shape = 's32[2]{0}', space=sflag, size = 0x8, scoped, tag = 'scoped memory for tpu_custom_call.1']
    #allocation5 [shape = 'u8[32768]{0}', space=vmem, size = 0x8000, scoped, tag = 'input window, operand 1']
    #allocation6 [shape = 's32[2]{0}', space=sflag, size = 0x8, scoped, tag = 'scoped memory for tpu_custom_call.1']
    #allocation7 [shape = 'u8[32768]{0}', space=vmem, size = 0x8000, scoped, tag = 'input window, operand 2']
    #allocation8 [shape = 'u8[32768]{0}', space=vmem, size = 0x8000, scoped, tag = 'output window, operand 0']
    #allocation9 [shape = 'u8[32768]{0}', space=vmem, size = 0x8000, scoped, tag = 'output window, operand 1']
    #allocation10 [shape = 's32[2]{0}', space=sflag, size = 0x8, scoped, tag = 'scoped memory for tpu_custom_call.1']
    %11 = vsyncpa [#allocation3], 0
    %s12 = scalar_lea.sflag [#allocation3], 1
    %13 = vsyncpa %s12, 0
    %14 = vsyncpa [#allocation6], 0
    %s15 = scalar_lea.sflag [#allocation6], 1
    %16 = vsyncpa %s15, 0
    %17 = vsyncpa [#allocation4], 0
    %s18 = scalar_lea.sflag [#allocation4], 1
    %19 = vsyncpa %s18, 0
    %20 = vsyncpa [#allocation10], 0
    %s21 = scalar_lea.sflag [#allocation10], 1
    %22 = vsyncpa %s21, 0
    loop: start=0, step=1, limit=4
    $region2: #{tpu_custom_call.1} parent=1 // loop_pre_header
      _
    $region3: #{tpu_custom_call.1} parent=1 // loop_header
      %s24 = sphi 0, %s28
      %p25 = scmp.ge.s32.totalorder %s24, 4
      %s31 = sphi 0, %s50
      %s32 = sphi 0, %s46
      %s33 = sphi 0, %s42
      %s34 = sphi 0, %s31
      %s35 = sphi 0, %s32
      %s36 = sphi 0, %s33
      %s37 = sphi 0, %s34
      %s38 = sphi 0, %s35
      %s39 = sphi 0, %s36
      %s57 = sphi 0, %s59
      %s60 = sphi 0, %s57
      %s61 = sphi 0, %s60
      %s77 = sphi 0, %s61
      %s85 = sphi 0, %s87
      %s88 = sphi 0, %s85
      %s89 = sphi 0, %s88
      %s105 = sphi 0, %s89
      %s113 = sphi 0, %s115
      %s116 = sphi 0, %s113
      %s117 = sphi 0, %s116
      %s133 = sphi 0, %s117
      %s141 = sphi 0, %s143
      %s144 = sphi 0, %s141
      %s145 = sphi 0, %s144
      %s161 = sphi 0, %s145
      %s171 = sphi 0, %s173
      %s174 = sphi 0, %s171
      %s175 = sphi 0, %s174
      %s191 = sphi 0, %s175
      %s201 = sphi 0, %s203
      %s204 = sphi 0, %s201
      %s205 = sphi 0, %s204
      %s221 = sphi 0, %s205
    $region4: #{tpu_custom_call.1} parent=1 // loop_header_branch
      %27 = sbr.rel (%p25) target = $region8
    $region5: #{tpu_custom_call.1} parent=1 // loop_body
      %s29 = ssub.s32 %s24, 1
      %s30 = ssub.s32 %s24, 2
      %s40 = sadd.s32 1, %s33
      %p41 = scmp.ge.s32.totalorder %s40, 1
      %s42 = scalar_select %p41, 0, %s40
      %s43 = sadd.s32 1, %s32
      %s44 = scalar_select %p41, %s43, %s32
      %p45 = scmp.ge.s32.totalorder %s44, 1
      %s46 = scalar_select %p45, 0, %s44
      %s47 = sadd.s32 1, %s31
      %s48 = scalar_select %p45, %s47, %s31
      %p49 = scmp.ge.s32.totalorder %s48, 2
      %s50 = scalar_select %p49, 0, %s48
      %s51 = ssub.s32 %s31, %s50
      %s52 = ssub.s32 %s32, %s46
      %s53 = sor.u32 %s51, %s52
      %s54 = ssub.s32 %s33, %s42
      %s55 = sor.u32 %s53, %s54
      %p56 = scmp.eq.s32.totalorder %s55, 0
      %s58 = sadd.s32 %s57, 1
      %s59 = scalar_select %p56, %s57, %s58
      %p62 = pneg %p56
      %p63 = scmp.eq.s32.totalorder %s24, 1
      %p64 = por %p62, %p63
      %p65 = scmp.ne.s32.totalorder %s57, %s60
      %p66 = scmp.eq.s32.totalorder %s24, 0
      %p67 = por %p65, %p66
      %p68 = scmp.ne.s32.totalorder %s57, %s60
      %p69 = scmp.eq.s32.totalorder %s29, 1
      %p70 = por %p68, %p69
      %p71 = scmp.ne.s32.totalorder %s60, %s61
      %p72 = scmp.eq.s32.totalorder %s29, 0
      %p73 = por %p71, %p72
      %p74 = scmp.ne.s32.totalorder %s60, %s61
      %p75 = scmp.eq.s32.totalorder %s30, 1
      %p76 = por %p74, %p75
      %p78 = scmp.ne.s32.totalorder %s61, %s77
      %p79 = scmp.eq.s32.totalorder %s30, 0
      %p80 = por %p78, %p79
      %s81 = ssub.s32 %s31, %s50
      %s82 = ssub.s32 %s32, %s46
      %s83 = sor.u32 %s81, %s82
      %p84 = scmp.eq.s32.totalorder %s83, 0
      %s86 = sadd.s32 %s85, 1
      %s87 = scalar_select %p84, %s85, %s86
      %p90 = pneg %p84
      %p91 = scmp.eq.s32.totalorder %s24, 1
      %p92 = por %p90, %p91
      %p93 = scmp.ne.s32.totalorder %s85, %s88
      %p94 = scmp.eq.s32.totalorder %s24, 0
      %p95 = por %p93, %p94
      %p96 = scmp.ne.s32.totalorder %s85, %s88
      %p97 = scmp.eq.s32.totalorder %s29, 1
      %p98 = por %p96, %p97
      %p99 = scmp.ne.s32.totalorder %s88, %s89
      %p100 = scmp.eq.s32.totalorder %s29, 0
      %p101 = por %p99, %p100
      %p102 = scmp.ne.s32.totalorder %s88, %s89
      %p103 = scmp.eq.s32.totalorder %s30, 1
      %p104 = por %p102, %p103
      %p106 = scmp.ne.s32.totalorder %s89, %s105
      %p107 = scmp.eq.s32.totalorder %s30, 0
      %p108 = por %p106, %p107
      %s109 = ssub.s32 %s31, %s50
      %s110 = ssub.s32 %s32, %s46
      %s111 = sor.u32 %s109, %s110
      %p112 = scmp.eq.s32.totalorder %s111, 0
      %s114 = sadd.s32 %s113, 1
      %s115 = scalar_select %p112, %s113, %s114
      %p118 = pneg %p112
      %p119 = scmp.eq.s32.totalorder %s24, 1
      %p120 = por %p118, %p119
      %p121 = scmp.ne.s32.totalorder %s113, %s116
      %p122 = scmp.eq.s32.totalorder %s24, 0
      %p123 = por %p121, %p122
      %p124 = scmp.ne.s32.totalorder %s113, %s116
      %p125 = scmp.eq.s32.totalorder %s29, 1
      %p126 = por %p124, %p125
      %p127 = scmp.ne.s32.totalorder %s116, %s117
      %p128 = scmp.eq.s32.totalorder %s29, 0
      %p129 = por %p127, %p128
      %p130 = scmp.ne.s32.totalorder %s116, %s117
      %p131 = scmp.eq.s32.totalorder %s30, 1
      %p132 = por %p130, %p131
      %p134 = scmp.ne.s32.totalorder %s117, %s133
      %p135 = scmp.eq.s32.totalorder %s30, 0
      %p136 = por %p134, %p135
      %s137 = ssub.s32 %s31, %s50
      %s138 = ssub.s32 %s33, %s42
      %s139 = sor.u32 %s137, %s138
      %p140 = scmp.eq.s32.totalorder %s139, 0
      %s142 = sadd.s32 %s141, 1
      %s143 = scalar_select %p140, %s141, %s142
      %p146 = pneg %p140
      %p147 = scmp.eq.s32.totalorder %s24, 1
      %p148 = por %p146, %p147
      %p149 = scmp.ne.s32.totalorder %s141, %s144
      %p150 = scmp.eq.s32.totalorder %s24, 0
      %p151 = por %p149, %p150
      %p152 = scmp.ne.s32.totalorder %s141, %s144
      %p153 = scmp.eq.s32.totalorder %s29, 1
      %p154 = por %p152, %p153
      %p155 = scmp.ne.s32.totalorder %s144, %s145
      %p156 = scmp.eq.s32.totalorder %s29, 0
      %p157 = por %p155, %p156
      %p158 = scmp.ne.s32.totalorder %s144, %s145
      %p159 = scmp.eq.s32.totalorder %s30, 1
      %p160 = por %p158, %p159
      %p162 = scmp.ne.s32.totalorder %s145, %s161
      %p163 = scmp.eq.s32.totalorder %s30, 0
      %p164 = por %p162, %p163
      %s165 = ssub.s32 %s31, %s50
      %s166 = ssub.s32 %s32, %s46
      %s167 = sor.u32 %s165, %s166
      %s168 = ssub.s32 %s33, %s42
      %s169 = sor.u32 %s167, %s168
      %p170 = scmp.eq.s32.totalorder %s169, 0
      %s172 = sadd.s32 %s171, 1
      %s173 = scalar_select %p170, %s171, %s172
      %p176 = pneg %p170
      %p177 = scmp.eq.s32.totalorder %s24, 1
      %p178 = por %p176, %p177
      %p179 = scmp.ne.s32.totalorder %s171, %s174
      %p180 = scmp.eq.s32.totalorder %s24, 0
      %p181 = por %p179, %p180
      %p182 = scmp.ne.s32.totalorder %s171, %s174
      %p183 = scmp.eq.s32.totalorder %s29, 1
      %p184 = por %p182, %p183
      %p185 = scmp.ne.s32.totalorder %s174, %s175
      %p186 = scmp.eq.s32.totalorder %s29, 0
      %p187 = por %p185, %p186
      %p188 = scmp.ne.s32.totalorder %s174, %s175
      %p189 = scmp.eq.s32.totalorder %s30, 1
      %p190 = por %p188, %p189
      %p192 = scmp.ne.s32.totalorder %s175, %s191
      %p193 = scmp.eq.s32.totalorder %s30, 0
      %p194 = por %p192, %p193
      %s195 = ssub.s32 %s31, %s50
      %s196 = ssub.s32 %s32, %s46
      %s197 = sor.u32 %s195, %s196
      %s198 = ssub.s32 %s33, %s42
      %s199 = sor.u32 %s197, %s198
      %p200 = scmp.eq.s32.totalorder %s199, 0
      %s202 = sadd.s32 %s201, 1
      %s203 = scalar_select %p200, %s201, %s202
      %p206 = pneg %p200
      %p207 = scmp.eq.s32.totalorder %s24, 1
      %p208 = por %p206, %p207
      %p209 = scmp.ne.s32.totalorder %s201, %s204
      %p210 = scmp.eq.s32.totalorder %s24, 0
      %p211 = por %p209, %p210
      %p212 = scmp.ne.s32.totalorder %s201, %s204
      %p213 = scmp.eq.s32.totalorder %s29, 1
      %p214 = por %p212, %p213
      %p215 = scmp.ne.s32.totalorder %s204, %s205
      %p216 = scmp.eq.s32.totalorder %s29, 0
      %p217 = por %p215, %p216
      %p218 = scmp.ne.s32.totalorder %s204, %s205
      %p219 = scmp.eq.s32.totalorder %s30, 1
      %p220 = por %p218, %p219
      %p222 = scmp.ne.s32.totalorder %s205, %s221
      %p223 = scmp.eq.s32.totalorder %s30, 0
      %p224 = por %p222, %p223
      %p225 = scmp.le.s32.totalorder 1, %s24
      %p226 = scmp.lt.s32.totalorder %s24, 3
      %p227 = pnand %p225, %p226
      %p228 = pneg %p227
      // Predicated region
      $region9: #{tpu_custom_call.1} parent=5 // pred_check
        _
      $region10: #{tpu_custom_call.1} parent=5 // pred_check_branch
        %230 = sbr.rel (%p227) target = $region12
      $region11: #{tpu_custom_call.1} parent=5 // pred_region
        %s231 = ssub.s32 %s24, 1
      $region12: #{tpu_custom_call.1} parent=5 // pred_fallthru
        _
      %p232 = scmp.lt.s32.totalorder %s24, 2
      // Predicated region
      $region13: #{tpu_custom_call.1} parent=5 // pred_check
        %p233 = pneg %p232
      $region14: #{tpu_custom_call.1} parent=5 // pred_check_branch
        %235 = sbr.rel (%p233) target = $region16
      $region15: #{tpu_custom_call.1} parent=5 // pred_region
        // Predicated region
        $region17: #{tpu_custom_call.1} parent=15 // pred_check
          %p236 = pneg %p67
        $region18: #{tpu_custom_call.1} parent=15 // pred_check_branch
          %238 = sbr.rel (%p236) target = $region20
        $region19: #{tpu_custom_call.1} parent=15 // pred_region
          %s239 = sand.u32 %s57, 1
          %s240 = scalar_lea.sflag [#allocation3], %s239
          %s241 = sand.u32 %s57, 1
          %s242 = smul.addr %s241, 32
          %s243 = scalar_lea.vmem [#allocation2], %s242
          %s244 = smul.u32 4, %s32
          %s246 = ssub.s32 512, 512
          %247 = vsyncadd %s240, %s246
          %s248 = sadd.s32 %s33, %s244
          %s249 = smul.addr %s31, 4
          %s250 = sadd.s32 %s248, %s249
          %s251 = smul.addr %s250, 128
          %s252 = scalar_lea.hbm %s0, %s251
          %s253 = sshll.u32 %s243, 4
          %s254 = int_to_ptr.vmem [resolvable:$true] %s253
          %259 = dma.hbm_to_vmem [thread:$0]  %s252, 512, %s254, %s240, 128, 128, 8
        $region20: #{tpu_custom_call.1} parent=15 // pred_fallthru
          _
        // Predicated region
        $region21: #{tpu_custom_call.1} parent=15 // pred_check
          %p260 = pneg %p95
        $region22: #{tpu_custom_call.1} parent=15 // pred_check_branch
          %262 = sbr.rel (%p260) target = $region24
        $region23: #{tpu_custom_call.1} parent=15 // pred_region
          %s263 = sand.u32 %s24, 1
          %s264 = scalar_lea.sflag [#allocation6], %s263
          %s265 = sand.u32 %s85, 1
          %s266 = smul.addr %s265, 32
          %s267 = scalar_lea.vmem [#allocation5], %s266
          %s268 = smul.u32 4, %s32
          %s270 = ssub.s32 512, 512
          %271 = vsyncadd %s264, %s270
          %s272 = smul.addr %s31, 4
          %s273 = sadd.s32 %s268, %s272
          %s274 = smul.addr %s273, 128
          %s275 = scalar_lea.hbm %s1, %s274
          %s276 = sshll.u32 %s267, 4
          %s277 = int_to_ptr.vmem [resolvable:$true] %s276
          %282 = dma.hbm_to_vmem [thread:$0]  %s275, 512, %s277, %s264, 128, 128, 8
        $region24: #{tpu_custom_call.1} parent=15 // pred_fallthru
          _
        // Predicated region
        $region25: #{tpu_custom_call.1} parent=15 // pred_check
          %p283 = pneg %p123
        $region26: #{tpu_custom_call.1} parent=15 // pred_check_branch
          %285 = sbr.rel (%p283) target = $region28
        $region27: #{tpu_custom_call.1} parent=15 // pred_region
          %s286 = sand.u32 %s24, 1
          %s287 = scalar_lea.sflag [#allocation6], %s286
          %s288 = sand.u32 %s113, 1
          %s289 = smul.addr %s288, 32
          %s290 = scalar_lea.vmem [#allocation7], %s289
          %s291 = smul.u32 4, %s32
          %s293 = ssub.s32 512, 512
          %294 = vsyncadd %s287, %s293
          %s295 = smul.addr %s31, 4
          %s296 = sadd.s32 %s291, %s295
          %s297 = smul.addr %s296, 128
          %s298 = scalar_lea.hbm %s2, %s297
          %s299 = sshll.u32 %s290, 4
          %s300 = int_to_ptr.vmem [resolvable:$true] %s299
          %305 = dma.hbm_to_vmem [thread:$0]  %s298, 512, %s300, %s287, 128, 128, 8
        $region28: #{tpu_custom_call.1} parent=15 // pred_fallthru
          _
        // Predicated region
        $region29: #{tpu_custom_call.1} parent=15 // pred_check
          %p306 = pneg %p151
        $region30: #{tpu_custom_call.1} parent=15 // pred_check_branch
          %308 = sbr.rel (%p306) target = $region32
        $region31: #{tpu_custom_call.1} parent=15 // pred_region
          %p309 = scmp.lt.s32.totalorder %s31, 1
          %s310 = scalar_select %p309, %s31, 1
          %p311 = scmp.lt.s32.totalorder %s33, 0
          %s312 = scalar_select %p311, %s33, 0
          %s313 = sadd.s32 %s312, %s310
          %s314 = smul.addr %s313, 8
          %s315 = scalar_lea.vmem %s3, %s314
        $region32: #{tpu_custom_call.1} parent=15 // pred_fallthru
          _
      $region16: #{tpu_custom_call.1} parent=5 // pred_fallthru
        _
      %p316 = scmp.le.s32.totalorder 1, %s24
      %p317 = scmp.lt.s32.totalorder %s24, 3
      %p318 = pnand %p316, %p317
      %p319 = pneg %p318
      // Predicated region
      $region33: #{tpu_custom_call.1} parent=5 // pred_check
        _
      $region34: #{tpu_custom_call.1} parent=5 // pred_check_branch
        %321 = sbr.rel (%p318) target = $region36
      $region35: #{tpu_custom_call.1} parent=5 // pred_region
        %s322 = ssub.s32 %s24, 1
        %s323 = sand.u32 %s60, 1
        %s324 = scalar_lea.sflag [#allocation3], %s323
        %s325 = sand.u32 %s60, 1
        %s326 = smul.addr %s325, 32
        %s327 = scalar_lea.vmem [#allocation2], %s326
        // Predicated region
        $region37: #{tpu_custom_call.1} parent=35 // pred_check
          %p328 = pneg %p73
        $region38: #{tpu_custom_call.1} parent=35 // pred_check_branch
          %330 = sbr.rel (%p328) target = $region40
        $region39: #{tpu_custom_call.1} parent=35 // pred_region
          %331 = dma.done %s324, 512
        $region40: #{tpu_custom_call.1} parent=35 // pred_fallthru
          _
        %s332 = sand.u32 %s29, 1
        %s333 = scalar_lea.sflag [#allocation6], %s332
        %s334 = sand.u32 %s88, 1
        %s335 = smul.addr %s334, 32
        %s336 = scalar_lea.vmem [#allocation5], %s335
        // Predicated region
        $region41: #{tpu_custom_call.1} parent=35 // pred_check
          %p337 = pneg %p101
        $region42: #{tpu_custom_call.1} parent=35 // pred_check_branch
          %339 = sbr.rel (%p337) target = $region44
        $region43: #{tpu_custom_call.1} parent=35 // pred_region
          %340 = dma.done %s333, 512
        $region44: #{tpu_custom_call.1} parent=35 // pred_fallthru
          _
        %s341 = sand.u32 %s29, 1
        %s342 = scalar_lea.sflag [#allocation6], %s341
        %s343 = sand.u32 %s116, 1
        %s344 = smul.addr %s343, 32
        %s345 = scalar_lea.vmem [#allocation7], %s344
        // Predicated region
        $region45: #{tpu_custom_call.1} parent=35 // pred_check
          %p346 = pneg %p129
        $region46: #{tpu_custom_call.1} parent=35 // pred_check_branch
          %348 = sbr.rel (%p346) target = $region48
        $region47: #{tpu_custom_call.1} parent=35 // pred_region
          %349 = dma.done %s342, 512
        $region48: #{tpu_custom_call.1} parent=35 // pred_fallthru
          _
        %s350 = sand.u32 %s60, 1
        %s351 = scalar_lea.sflag [#allocation3], %s350
        %s352 = sand.u32 %s60, 1
        %s353 = smul.addr %s352, 32
        %s354 = scalar_lea.vmem [#allocation2], %s353
        %p355 = pneg %p73
        %p356 = pneg %p70
        %s357 = sand.u32 %s29, 1
        %s358 = scalar_lea.sflag [#allocation6], %s357
        %s359 = sand.u32 %s88, 1
        %s360 = smul.addr %s359, 32
        %s361 = scalar_lea.vmem [#allocation5], %s360
        %p362 = pneg %p101
        %p363 = pneg %p98
        %s364 = sand.u32 %s29, 1
        %s365 = scalar_lea.sflag [#allocation6], %s364
        %s366 = sand.u32 %s116, 1
        %s367 = smul.addr %s366, 32
        %s368 = scalar_lea.vmem [#allocation7], %s367
        %p369 = pneg %p129
        %p370 = pneg %p126
        %p371 = scmp.lt.s32.totalorder %s34, 1
        %s372 = scalar_select %p371, %s34, 1
        %p373 = scmp.lt.s32.totalorder %s36, 0
        %s374 = scalar_select %p373, %s36, 0
        %s375 = sadd.s32 %s374, %s372
        %s376 = smul.addr %s375, 8
        %s377 = scalar_lea.vmem %s3, %s376
        %p378 = pneg %p157
        %p379 = pneg %p154
        %p380 = pneg %p187
        %p381 = pneg %p184
        %s382 = sand.u32 %s174, 1
        %s383 = scalar_lea.sflag [#allocation4], %s382
        %s384 = sand.u32 %s174, 1
        %s385 = smul.addr %s384, 32
        %s386 = scalar_lea.vmem [#allocation8], %s385
        %p387 = pneg %p217
        %p388 = pneg %p214
        %s389 = sand.u32 %s204, 1
        %s390 = scalar_lea.sflag [#allocation10], %s389
        %s391 = sand.u32 %s204, 1
        %s392 = smul.addr %s391, 32
        %s393 = scalar_lea.vmem [#allocation9], %s392
        %s394 = smul.u32 4, %s35
        %s395 = smul.u32 4, %s35
        %s396 = smul.u32 4, %s35
        %p397 = scmp.lt.s32.totalorder %s34, 1
        %s398 = scalar_select %p397, %s34, 1
        %p399 = scmp.lt.s32.totalorder %s36, 0
        %s400 = scalar_select %p399, %s36, 0
        %s401 = sadd.s32 %s400, %s398
        %s402 = smul.addr %s401, 8
        %s403 = scalar_lea.vmem %s3, %s402
        %s404 = smul.u32 4, %s35
        %s405 = smul.u32 4, %s35
        %v406 = vld [vmem:[%s327] sm:$0xff]
        %v407 = vld [vmem:[%s327 + $0x8] sm:$0xff]
        %v408 = vld [vmem:[%s327 + $0x10] sm:$0xff]
        %v409 = vld [vmem:[%s327 + $0x18] sm:$0xff]
        %v410 = vld [vmem:[%s336] sm:$0xff]
        %v411 = vld [vmem:[%s336 + $0x8] sm:$0xff]
        %v412 = vld [vmem:[%s336 + $0x10] sm:$0xff]
        %v413 = vld [vmem:[%s336 + $0x18] sm:$0xff]
        %vm414 = vcmask 261120
        %v416 = vsel %vm414, %v406, 0
        %v419 = vsel %vm414, %v410, 0
        %421 = vmatprep.subr.mxu0 0.0
        %422 = vmatpush1.xpose.msra.mxu0 %v419
        %423 = vmatprep.subr.mxu0 0.0
        %424 = vmatpush1.xpose.msra.mxu0 0.0
        %425 = vmatprep.subr.mxu0 0.0
        %426 = vmatpush1.xpose.msra.mxu0 0.0
        %427 = vmatprep.subr.mxu0 0.0
        %428 = vmatpush1.xpose.msra.mxu0 0.0
        %429 = vmatprep.subr.mxu0 0.0
        %430 = vmatpush1.xpose.msra.mxu0 0.0
        %431 = vmatprep.subr.mxu0 0.0
        %432 = vmatpush1.xpose.msra.mxu0 0.0
        %433 = vmatprep.subr.mxu0 0.0
        %434 = vmatpush1.xpose.msra.mxu0 0.0
        %435 = vmatprep.subr.mxu0 0.0
        %436 = vmatpush1.xpose.msra.mxu0 0.0
        %437 = vmatprep.subr.mxu0 0.0
        %438 = vmatpush1.xpose.msra.mxu0 0.0
        %439 = vmatprep.subr.mxu0 0.0
        %440 = vmatpush1.xpose.msra.mxu0 0.0
        %441 = vmatprep.subr.mxu0 0.0
        %442 = vmatpush1.xpose.msra.mxu0 0.0
        %443 = vmatprep.subr.mxu0 0.0
        %444 = vmatpush1.xpose.msra.mxu0 0.0
        %445 = vmatprep.subr.mxu0 0.0
        %446 = vmatpush1.xpose.msra.mxu0 0.0
        %447 = vmatprep.subr.mxu0 0.0
        %448 = vmatpush1.xpose.msra.mxu0 0.0
        %449 = vmatprep.subr.mxu0 0.0
        %450 = vmatpush1.xpose.msra.mxu0 0.0
        %451 = vmatprep.subr.mxu0 0.0
        %452 = vmatpush1.xpose.msra.mxu0 0.0
        %453 = vmatprep.subr.mxu0 0.0
        %454 = vmatpush1.xpose.msra.mxu0 0.0
        %455 = vmatprep.subr.mxu0 0.0
        %456 = vmatpush1.xpose.msra.mxu0 0.0
        %457 = vmatprep.subr.mxu0 0.0
        %458 = vmatpush1.xpose.msra.mxu0 0.0
        %459 = vmatprep.subr.mxu0 0.0
        %460 = vmatpush1.xpose.msra.mxu0 0.0
        %461 = vmatprep.subr.mxu0 0.0
        %462 = vmatpush1.xpose.msra.mxu0 0.0
        %463 = vmatprep.subr.mxu0 0.0
        %464 = vmatpush1.xpose.msra.mxu0 0.0
        %465 = vmatprep.subr.mxu0 0.0
        %466 = vmatpush1.xpose.msra.mxu0 0.0
        %467 = vmatprep.subr.mxu0 0.0
        %468 = vmatpush1.xpose.msra.mxu0 0.0
        %469 = vmatprep.subr.mxu0 0.0
        %470 = vmatpush1.xpose.msra.mxu0 0.0
        %471 = vmatprep.subr.mxu0 0.0
        %472 = vmatpush1.xpose.msra.mxu0 0.0
        %473 = vmatprep.subr.mxu0 0.0
        %474 = vmatpush1.xpose.msra.mxu0 0.0
        %475 = vmatprep.subr.mxu0 0.0
        %476 = vmatpush1.xpose.msra.mxu0 0.0
        %477 = vmatprep.subr.mxu0 0.0
        %478 = vmatpush1.xpose.msra.mxu0 0.0
        %479 = vmatprep.subr.mxu0 0.0
        %480 = vmatpush1.xpose.msra.mxu0 0.0
        %481 = vmatprep.subr.mxu0 0.0
        %482 = vmatpush1.xpose.msra.mxu0 0.0
        %483 = vmatprep.subr.mxu0 0.0
        %484 = vmatpush1.xpose.msra.mxu0 0.0
        %485 = vmatprep.mubr.f32.mxu0 0.0
        %486 = vmatmul.mubr.f32.gmra.mrb[0].mxu0 %v416
        %v487 = vpop.f32.mrb[0].mxu0
        %v488 = vadd.f32 0.0, %v487
        %v489 = vpop.f32.mrb[0].mxu0
        %490 = vdwg.mxu0
        %v492 = vsel %vm414, %v407, 0
        %v495 = vsel %vm414, %v411, 0
        %497 = vmatprep.subr.mxu0 0.0
        %498 = vmatpush1.xpose.msra.mxu0 %v495
        %499 = vmatprep.subr.mxu0 0.0
        %500 = vmatpush1.xpose.msra.mxu0 0.0
        %501 = vmatprep.subr.mxu0 0.0
        %502 = vmatpush1.xpose.msra.mxu0 0.0
        %503 = vmatprep.subr.mxu0 0.0
        %504 = vmatpush1.xpose.msra.mxu0 0.0
        %505 = vmatprep.subr.mxu0 0.0
        %506 = vmatpush1.xpose.msra.mxu0 0.0
        %507 = vmatprep.subr.mxu0 0.0
        %508 = vmatpush1.xpose.msra.mxu0 0.0
        %509 = vmatprep.subr.mxu0 0.0
        %510 = vmatpush1.xpose.msra.mxu0 0.0
        %511 = vmatprep.subr.mxu0 0.0
        %512 = vmatpush1.xpose.msra.mxu0 0.0
        %513 = vmatprep.subr.mxu0 0.0
        %514 = vmatpush1.xpose.msra.mxu0 0.0
        %515 = vmatprep.subr.mxu0 0.0
        %516 = vmatpush1.xpose.msra.mxu0 0.0
        %517 = vmatprep.subr.mxu0 0.0
        %518 = vmatpush1.xpose.msra.mxu0 0.0
        %519 = vmatprep.subr.mxu0 0.0
        %520 = vmatpush1.xpose.msra.mxu0 0.0
        %521 = vmatprep.subr.mxu0 0.0
        %522 = vmatpush1.xpose.msra.mxu0 0.0
        %523 = vmatprep.subr.mxu0 0.0
        %524 = vmatpush1.xpose.msra.mxu0 0.0
        %525 = vmatprep.subr.mxu0 0.0
        %526 = vmatpush1.xpose.msra.mxu0 0.0
        %527 = vmatprep.subr.mxu0 0.0
        %528 = vmatpush1.xpose.msra.mxu0 0.0
        %529 = vmatprep.subr.mxu0 0.0
        %530 = vmatpush1.xpose.msra.mxu0 0.0
        %531 = vmatprep.subr.mxu0 0.0
        %532 = vmatpush1.xpose.msra.mxu0 0.0
        %533 = vmatprep.subr.mxu0 0.0
        %534 = vmatpush1.xpose.msra.mxu0 0.0
        %535 = vmatprep.subr.mxu0 0.0
        %536 = vmatpush1.xpose.msra.mxu0 0.0
        %537 = vmatprep.subr.mxu0 0.0
        %538 = vmatpush1.xpose.msra.mxu0 0.0
        %539 = vmatprep.subr.mxu0 0.0
        %540 = vmatpush1.xpose.msra.mxu0 0.0
        %541 = vmatprep.subr.mxu0 0.0
        %542 = vmatpush1.xpose.msra.mxu0 0.0
        %543 = vmatprep.subr.mxu0 0.0
        %544 = vmatpush1.xpose.msra.mxu0 0.0
        %545 = vmatprep.subr.mxu0 0.0
        %546 = vmatpush1.xpose.msra.mxu0 0.0
        %547 = vmatprep.subr.mxu0 0.0
        %548 = vmatpush1.xpose.msra.mxu0 0.0
        %549 = vmatprep.subr.mxu0 0.0
        %550 = vmatpush1.xpose.msra.mxu0 0.0
        %551 = vmatprep.subr.mxu0 0.0
        %552 = vmatpush1.xpose.msra.mxu0 0.0
        %553 = vmatprep.subr.mxu0 0.0
        %554 = vmatpush1.xpose.msra.mxu0 0.0
        %555 = vmatprep.subr.mxu0 0.0
        %556 = vmatpush1.xpose.msra.mxu0 0.0
        %557 = vmatprep.subr.mxu0 0.0
        %558 = vmatpush1.xpose.msra.mxu0 0.0
        %559 = vmatprep.subr.mxu0 0.0
        %560 = vmatpush1.xpose.msra.mxu0 0.0
        %561 = vmatprep.mubr.f32.mxu0 0.0
        %562 = vmatmul.mubr.f32.gmra.mrb[0].mxu0 %v492
        %v563 = vpop.f32.mrb[0].mxu0
        %v564 = vadd.f32 0.0, %v563
        %v565 = vpop.f32.mrb[0].mxu0
        %566 = vdwg.mxu0
        %v568 = vsel %vm414, %v408, 0
        %v571 = vsel %vm414, %v412, 0
        %573 = vmatprep.subr.mxu0 0.0
        %574 = vmatpush1.xpose.msra.mxu0 %v571
        %575 = vmatprep.subr.mxu0 0.0
        %576 = vmatpush1.xpose.msra.mxu0 0.0
        %577 = vmatprep.subr.mxu0 0.0
        %578 = vmatpush1.xpose.msra.mxu0 0.0
        %579 = vmatprep.subr.mxu0 0.0
        %580 = vmatpush1.xpose.msra.mxu0 0.0
        %581 = vmatprep.subr.mxu0 0.0
        %582 = vmatpush1.xpose.msra.mxu0 0.0
        %583 = vmatprep.subr.mxu0 0.0
        %584 = vmatpush1.xpose.msra.mxu0 0.0
        %585 = vmatprep.subr.mxu0 0.0
        %586 = vmatpush1.xpose.msra.mxu0 0.0
        %587 = vmatprep.subr.mxu0 0.0
        %588 = vmatpush1.xpose.msra.mxu0 0.0
        %589 = vmatprep.subr.mxu0 0.0
        %590 = vmatpush1.xpose.msra.mxu0 0.0
        %591 = vmatprep.subr.mxu0 0.0
        %592 = vmatpush1.xpose.msra.mxu0 0.0
        %593 = vmatprep.subr.mxu0 0.0
        %594 = vmatpush1.xpose.msra.mxu0 0.0
        %595 = vmatprep.subr.mxu0 0.0
        %596 = vmatpush1.xpose.msra.mxu0 0.0
        %597 = vmatprep.subr.mxu0 0.0
        %598 = vmatpush1.xpose.msra.mxu0 0.0
        %599 = vmatprep.subr.mxu0 0.0
        %600 = vmatpush1.xpose.msra.mxu0 0.0
        %601 = vmatprep.subr.mxu0 0.0
        %602 = vmatpush1.xpose.msra.mxu0 0.0
        %603 = vmatprep.subr.mxu0 0.0
        %604 = vmatpush1.xpose.msra.mxu0 0.0
        %605 = vmatprep.subr.mxu0 0.0
        %606 = vmatpush1.xpose.msra.mxu0 0.0
        %607 = vmatprep.subr.mxu0 0.0
        %608 = vmatpush1.xpose.msra.mxu0 0.0
        %609 = vmatprep.subr.mxu0 0.0
        %610 = vmatpush1.xpose.msra.mxu0 0.0
        %611 = vmatprep.subr.mxu0 0.0
        %612 = vmatpush1.xpose.msra.mxu0 0.0
        %613 = vmatprep.subr.mxu0 0.0
        %614 = vmatpush1.xpose.msra.mxu0 0.0
        %615 = vmatprep.subr.mxu0 0.0
        %616 = vmatpush1.xpose.msra.mxu0 0.0
        %617 = vmatprep.subr.mxu0 0.0
        %618 = vmatpush1.xpose.msra.mxu0 0.0
        %619 = vmatprep.subr.mxu0 0.0
        %620 = vmatpush1.xpose.msra.mxu0 0.0
        %621 = vmatprep.subr.mxu0 0.0
        %622 = vmatpush1.xpose.msra.mxu0 0.0
        %623 = vmatprep.subr.mxu0 0.0
        %624 = vmatpush1.xpose.msra.mxu0 0.0
        %625 = vmatprep.subr.mxu0 0.0
        %626 = vmatpush1.xpose.msra.mxu0 0.0
        %627 = vmatprep.subr.mxu0 0.0
        %628 = vmatpush1.xpose.msra.mxu0 0.0
        %629 = vmatprep.subr.mxu0 0.0
        %630 = vmatpush1.xpose.msra.mxu0 0.0
        %631 = vmatprep.subr.mxu0 0.0
        %632 = vmatpush1.xpose.msra.mxu0 0.0
        %633 = vmatprep.subr.mxu0 0.0
        %634 = vmatpush1.xpose.msra.mxu0 0.0
        %635 = vmatprep.subr.mxu0 0.0
        %636 = vmatpush1.xpose.msra.mxu0 0.0
        %637 = vmatprep.mubr.f32.mxu0 0.0
        %638 = vmatmul.mubr.f32.gmra.mrb[0].mxu0 %v568
        %v639 = vpop.f32.mrb[0].mxu0
        %v640 = vadd.f32 0.0, %v639
        %v641 = vpop.f32.mrb[0].mxu0
        %642 = vdwg.mxu0
        %v644 = vsel %vm414, %v409, 0
        %v647 = vsel %vm414, %v413, 0
        %649 = vmatprep.subr.mxu0 0.0
        %650 = vmatpush1.xpose.msra.mxu0 %v647
        %651 = vmatprep.subr.mxu0 0.0
        %652 = vmatpush1.xpose.msra.mxu0 0.0
        %653 = vmatprep.subr.mxu0 0.0
        %654 = vmatpush1.xpose.msra.mxu0 0.0
        %655 = vmatprep.subr.mxu0 0.0
        %656 = vmatpush1.xpose.msra.mxu0 0.0
        %657 = vmatprep.subr.mxu0 0.0
        %658 = vmatpush1.xpose.msra.mxu0 0.0
        %659 = vmatprep.subr.mxu0 0.0
        %660 = vmatpush1.xpose.msra.mxu0 0.0
        %661 = vmatprep.subr.mxu0 0.0
        %662 = vmatpush1.xpose.msra.mxu0 0.0
        %663 = vmatprep.subr.mxu0 0.0
        %664 = vmatpush1.xpose.msra.mxu0 0.0
        %665 = vmatprep.subr.mxu0 0.0
        %666 = vmatpush1.xpose.msra.mxu0 0.0
        %667 = vmatprep.subr.mxu0 0.0
        %668 = vmatpush1.xpose.msra.mxu0 0.0
        %669 = vmatprep.subr.mxu0 0.0
        %670 = vmatpush1.xpose.msra.mxu0 0.0
        %671 = vmatprep.subr.mxu0 0.0
        %672 = vmatpush1.xpose.msra.mxu0 0.0
        %673 = vmatprep.subr.mxu0 0.0
        %674 = vmatpush1.xpose.msra.mxu0 0.0
        %675 = vmatprep.subr.mxu0 0.0
        %676 = vmatpush1.xpose.msra.mxu0 0.0
        %677 = vmatprep.subr.mxu0 0.0
        %678 = vmatpush1.xpose.msra.mxu0 0.0
        %679 = vmatprep.subr.mxu0 0.0
        %680 = vmatpush1.xpose.msra.mxu0 0.0
        %681 = vmatprep.subr.mxu0 0.0
        %682 = vmatpush1.xpose.msra.mxu0 0.0
        %683 = vmatprep.subr.mxu0 0.0
        %684 = vmatpush1.xpose.msra.mxu0 0.0
        %685 = vmatprep.subr.mxu0 0.0
        %686 = vmatpush1.xpose.msra.mxu0 0.0
        %687 = vmatprep.subr.mxu0 0.0
        %688 = vmatpush1.xpose.msra.mxu0 0.0
        %689 = vmatprep.subr.mxu0 0.0
        %690 = vmatpush1.xpose.msra.mxu0 0.0
        %691 = vmatprep.subr.mxu0 0.0
        %692 = vmatpush1.xpose.msra.mxu0 0.0
        %693 = vmatprep.subr.mxu0 0.0
        %694 = vmatpush1.xpose.msra.mxu0 0.0
        %695 = vmatprep.subr.mxu0 0.0
        %696 = vmatpush1.xpose.msra.mxu0 0.0
        %697 = vmatprep.subr.mxu0 0.0
        %698 = vmatpush1.xpose.msra.mxu0 0.0
        %699 = vmatprep.subr.mxu0 0.0
        %700 = vmatpush1.xpose.msra.mxu0 0.0
        %701 = vmatprep.subr.mxu0 0.0
        %702 = vmatpush1.xpose.msra.mxu0 0.0
        %703 = vmatprep.subr.mxu0 0.0
        %704 = vmatpush1.xpose.msra.mxu0 0.0
        %705 = vmatprep.subr.mxu0 0.0
        %706 = vmatpush1.xpose.msra.mxu0 0.0
        %707 = vmatprep.subr.mxu0 0.0
        %708 = vmatpush1.xpose.msra.mxu0 0.0
        %709 = vmatprep.subr.mxu0 0.0
        %710 = vmatpush1.xpose.msra.mxu0 0.0
        %711 = vmatprep.subr.mxu0 0.0
        %712 = vmatpush1.xpose.msra.mxu0 0.0
        %713 = vmatprep.mubr.f32.mxu0 0.0
        %714 = vmatmul.mubr.f32.gmra.mrb[0].mxu0 %v644
        %v715 = vpop.f32.mrb[0].mxu0
        %v716 = vadd.f32 0.0, %v715
        %v717 = vpop.f32.mrb[0].mxu0
        %718 = vdwg.mxu0
        %v719 = vld [vmem:[%s403] sm:$0xff]
        %721 = vset.pattern.permute.xlu0 0
        %722 = vperm.xlu0 %721, %v719
        %v723 = vpop.permute.xlu0 %722
        %v725 = vmul.f32 %v488, %v723
        %v726 = vmul.f32 %v564, %v723
        %v727 = vmul.f32 %v640, %v723
        %v728 = vmul.f32 %v716, %v723
        %729 = vset.pattern.permute.xlu0 1
        %730 = vperm.xlu0 %729, %v719
        %v731 = vpop.permute.xlu0 %730
        %v733 = vadd.f32 %v725, %v731
        %v734 = vadd.f32 %v726, %v731
        %v735 = vadd.f32 %v727, %v731
        %v736 = vadd.f32 %v728, %v731
        %vm737 = vcmask 64512
        %v738 = vsel %vm737, %v733, -inf
        %739 = vmax.xlane.f32.xlu0 %v738
        %v740 = vpop.xlane.xlu0 %739
        %v741 = vsel %vm737, %v734, -inf
        %742 = vmax.xlane.f32.xlu0 %v741
        %v743 = vpop.xlane.xlu0 %742
        %v744 = vsel %vm737, %v735, -inf
        %745 = vmax.xlane.f32.xlu0 %v744
        %v746 = vpop.xlane.xlu0 %745
        %v747 = vsel %vm737, %v736, -inf
        %748 = vmax.xlane.f32.xlu0 %v747
        %v749 = vpop.xlane.xlu0 %748
        %v750 = vsub.f32 %v733, %v740
        %v751 = vsub.f32 %v734, %v743
        %v752 = vsub.f32 %v735, %v746
        %v753 = vsub.f32 %v736, %v749
        %v754 = vmul.f32 %v750, 1.442695
        %v755 = vpow.pop %v754
        %v756 = vmul.f32 %v751, 1.442695
        %v757 = vpow.pop %v756
        %v758 = vmul.f32 %v752, 1.442695
        %v759 = vpow.pop %v758
        %v760 = vmul.f32 %v753, 1.442695
        %v761 = vpow.pop %v760
        %v762 = vsel %vm737, %v755, 0.0
        %763 = vadd.xlane.f32.xlu0 %v762
        %v764 = vpop.xlane.xlu0 %763
        %v765 = vsel %vm737, %v757, 0.0
        %766 = vadd.xlane.f32.xlu0 %v765
        %v767 = vpop.xlane.xlu0 %766
        %v768 = vsel %vm737, %v759, 0.0
        %769 = vadd.xlane.f32.xlu0 %v768
        %v770 = vpop.xlane.xlu0 %769
        %v771 = vsel %vm737, %v761, 0.0
        %772 = vadd.xlane.f32.xlu0 %v771
        %v773 = vpop.xlane.xlu0 %772
        %v774 = vrcp.pop %v764
        %v775 = vrcp.pop %v767
        %v776 = vrcp.pop %v770
        %v777 = vrcp.pop %v773
        %v778 = vmul.f32 %v764, %v774
        %v779 = vmul.f32 %v767, %v775
        %v780 = vmul.f32 %v770, %v776
        %v781 = vmul.f32 %v773, %v777
        %v782 = vsub.f32 2.0, %v778
        %v783 = vsub.f32 2.0, %v779
        %v784 = vsub.f32 2.0, %v780
        %v785 = vsub.f32 2.0, %v781
        %v786 = vmul.f32 %v774, %v782
        %v787 = vmul.f32 %v775, %v783
        %v788 = vmul.f32 %v776, %v784
        %v789 = vmul.f32 %v777, %v785
        %v790 = vmul.f32 %v755, %v786
        %v791 = vmul.f32 %v757, %v787
        %v792 = vmul.f32 %v759, %v788
        %v793 = vmul.f32 %v761, %v789
        %794 = vst.msk [vmem:[%s393] sm:$0xff] %vm737, %v790
        %795 = vst.msk [vmem:[%s393 + $0x8] sm:$0xff] %vm737, %v791
        %796 = vst.msk [vmem:[%s393 + $0x10] sm:$0xff] %vm737, %v792
        %797 = vst.msk [vmem:[%s393 + $0x18] sm:$0xff] %vm737, %v793
        %v798 = vld [vmem:[%s345] sm:$0xff]
        %v799 = vld [vmem:[%s345 + $0x8] sm:$0xff]
        %v800 = vld [vmem:[%s345 + $0x10] sm:$0xff]
        %v801 = vld [vmem:[%s345 + $0x18] sm:$0xff]
        %v803 = vsel %vm737, %v790, 0
        %805 = vmatprep.subr.mxu0 0.0
        %806 = vmatpush1.msra.mxu0 %v798
        %807 = vmatprep.subr.mxu0 0.0
        %808 = vmatpush1.msra.mxu0 0.0
        %809 = vmatprep.subr.mxu0 0.0
        %810 = vmatpush1.msra.mxu0 0.0
        %811 = vmatprep.subr.mxu0 0.0
        %812 = vmatpush1.msra.mxu0 0.0
        %813 = vmatprep.subr.mxu0 0.0
        %814 = vmatpush1.msra.mxu0 0.0
        %815 = vmatprep.subr.mxu0 0.0
        %816 = vmatpush1.msra.mxu0 0.0
        %817 = vmatprep.subr.mxu0 0.0
        %818 = vmatpush1.msra.mxu0 0.0
        %819 = vmatprep.subr.mxu0 0.0
        %820 = vmatpush1.msra.mxu0 0.0
        %821 = vmatprep.subr.mxu0 0.0
        %822 = vmatpush1.msra.mxu0 0.0
        %823 = vmatprep.subr.mxu0 0.0
        %824 = vmatpush1.msra.mxu0 0.0
        %825 = vmatprep.subr.mxu0 0.0
        %826 = vmatpush1.msra.mxu0 0.0
        %827 = vmatprep.subr.mxu0 0.0
        %828 = vmatpush1.msra.mxu0 0.0
        %829 = vmatprep.subr.mxu0 0.0
        %830 = vmatpush1.msra.mxu0 0.0
        %831 = vmatprep.subr.mxu0 0.0
        %832 = vmatpush1.msra.mxu0 0.0
        %833 = vmatprep.subr.mxu0 0.0
        %834 = vmatpush1.msra.mxu0 0.0
        %835 = vmatprep.subr.mxu0 0.0
        %836 = vmatpush1.msra.mxu0 0.0
        %837 = vmatprep.subr.mxu0 0.0
        %838 = vmatpush1.msra.mxu0 0.0
        %839 = vmatprep.subr.mxu0 0.0
        %840 = vmatpush1.msra.mxu0 0.0
        %841 = vmatprep.subr.mxu0 0.0
        %842 = vmatpush1.msra.mxu0 0.0
        %843 = vmatprep.subr.mxu0 0.0
        %844 = vmatpush1.msra.mxu0 0.0
        %845 = vmatprep.subr.mxu0 0.0
        %846 = vmatpush1.msra.mxu0 0.0
        %847 = vmatprep.subr.mxu0 0.0
        %848 = vmatpush1.msra.mxu0 0.0
        %849 = vmatprep.subr.mxu0 0.0
        %850 = vmatpush1.msra.mxu0 0.0
        %851 = vmatprep.subr.mxu0 0.0
        %852 = vmatpush1.msra.mxu0 0.0
        %853 = vmatprep.subr.mxu0 0.0
        %854 = vmatpush1.msra.mxu0 0.0
        %855 = vmatprep.subr.mxu0 0.0
        %856 = vmatpush1.msra.mxu0 0.0
        %857 = vmatprep.subr.mxu0 0.0
        %858 = vmatpush1.msra.mxu0 0.0
        %859 = vmatprep.subr.mxu0 0.0
        %860 = vmatpush1.msra.mxu0 0.0
        %861 = vmatprep.subr.mxu0 0.0
        %862 = vmatpush1.msra.mxu0 0.0
        %863 = vmatprep.subr.mxu0 0.0
        %864 = vmatpush1.msra.mxu0 0.0
        %865 = vmatprep.subr.mxu0 0.0
        %866 = vmatpush1.msra.mxu0 0.0
        %867 = vmatprep.subr.mxu0 0.0
        %868 = vmatpush1.msra.mxu0 0.0
        %869 = vmatprep.mubr.f32.mxu0 0.0
        %870 = vmatmul.mubr.f32.gmra.mrb[0].mxu0 %v803
        %v871 = vpop.f32.mrb[0].mxu0
        %v872 = vadd.f32 0.0, %v871
        %v873 = vpop.f32.mrb[0].mxu0
        %874 = vdwg.mxu0
        %v876 = vsel %vm737, %v791, 0
        %878 = vmatprep.subr.mxu0 0.0
        %879 = vmatpush1.msra.mxu0 %v799
        %880 = vmatprep.subr.mxu0 0.0
        %881 = vmatpush1.msra.mxu0 0.0
        %882 = vmatprep.subr.mxu0 0.0
        %883 = vmatpush1.msra.mxu0 0.0
        %884 = vmatprep.subr.mxu0 0.0
        %885 = vmatpush1.msra.mxu0 0.0
        %886 = vmatprep.subr.mxu0 0.0
        %887 = vmatpush1.msra.mxu0 0.0
        %888 = vmatprep.subr.mxu0 0.0
        %889 = vmatpush1.msra.mxu0 0.0
        %890 = vmatprep.subr.mxu0 0.0
        %891 = vmatpush1.msra.mxu0 0.0
        %892 = vmatprep.subr.mxu0 0.0
        %893 = vmatpush1.msra.mxu0 0.0
        %894 = vmatprep.subr.mxu0 0.0
        %895 = vmatpush1.msra.mxu0 0.0
        %896 = vmatprep.subr.mxu0 0.0
        %897 = vmatpush1.msra.mxu0 0.0
        %898 = vmatprep.subr.mxu0 0.0
        %899 = vmatpush1.msra.mxu0 0.0
        %900 = vmatprep.subr.mxu0 0.0
        %901 = vmatpush1.msra.mxu0 0.0
        %902 = vmatprep.subr.mxu0 0.0
        %903 = vmatpush1.msra.mxu0 0.0
        %904 = vmatprep.subr.mxu0 0.0
        %905 = vmatpush1.msra.mxu0 0.0
        %906 = vmatprep.subr.mxu0 0.0
        %907 = vmatpush1.msra.mxu0 0.0
        %908 = vmatprep.subr.mxu0 0.0
        %909 = vmatpush1.msra.mxu0 0.0
        %910 = vmatprep.subr.mxu0 0.0
        %911 = vmatpush1.msra.mxu0 0.0
        %912 = vmatprep.subr.mxu0 0.0
        %913 = vmatpush1.msra.mxu0 0.0
        %914 = vmatprep.subr.mxu0 0.0
        %915 = vmatpush1.msra.mxu0 0.0
        %916 = vmatprep.subr.mxu0 0.0
        %917 = vmatpush1.msra.mxu0 0.0
        %918 = vmatprep.subr.mxu0 0.0
        %919 = vmatpush1.msra.mxu0 0.0
        %920 = vmatprep.subr.mxu0 0.0
        %921 = vmatpush1.msra.mxu0 0.0
        %922 = vmatprep.subr.mxu0 0.0
        %923 = vmatpush1.msra.mxu0 0.0
        %924 = vmatprep.subr.mxu0 0.0
        %925 = vmatpush1.msra.mxu0 0.0
        %926 = vmatprep.subr.mxu0 0.0
        %927 = vmatpush1.msra.mxu0 0.0
        %928 = vmatprep.subr.mxu0 0.0
        %929 = vmatpush1.msra.mxu0 0.0
        %930 = vmatprep.subr.mxu0 0.0
        %931 = vmatpush1.msra.mxu0 0.0
        %932 = vmatprep.subr.mxu0 0.0
        %933 = vmatpush1.msra.mxu0 0.0
        %934 = vmatprep.subr.mxu0 0.0
        %935 = vmatpush1.msra.mxu0 0.0
        %936 = vmatprep.subr.mxu0 0.0
        %937 = vmatpush1.msra.mxu0 0.0
        %938 = vmatprep.subr.mxu0 0.0
        %939 = vmatpush1.msra.mxu0 0.0
        %940 = vmatprep.subr.mxu0 0.0
        %941 = vmatpush1.msra.mxu0 0.0
        %942 = vmatprep.mubr.f32.mxu0 0.0
        %943 = vmatmul.mubr.f32.gmra.mrb[0].mxu0 %v876
        %v944 = vpop.f32.mrb[0].mxu0
        %v945 = vadd.f32 0.0, %v944
        %v946 = vpop.f32.mrb[0].mxu0
        %947 = vdwg.mxu0
        %v949 = vsel %vm737, %v792, 0
        %951 = vmatprep.subr.mxu0 0.0
        %952 = vmatpush1.msra.mxu0 %v800
        %953 = vmatprep.subr.mxu0 0.0
        %954 = vmatpush1.msra.mxu0 0.0
        %955 = vmatprep.subr.mxu0 0.0
        %956 = vmatpush1.msra.mxu0 0.0
        %957 = vmatprep.subr.mxu0 0.0
        %958 = vmatpush1.msra.mxu0 0.0
        %959 = vmatprep.subr.mxu0 0.0
        %960 = vmatpush1.msra.mxu0 0.0
        %961 = vmatprep.subr.mxu0 0.0
        %962 = vmatpush1.msra.mxu0 0.0
        %963 = vmatprep.subr.mxu0 0.0
        %964 = vmatpush1.msra.mxu0 0.0
        %965 = vmatprep.subr.mxu0 0.0
        %966 = vmatpush1.msra.mxu0 0.0
        %967 = vmatprep.subr.mxu0 0.0
        %968 = vmatpush1.msra.mxu0 0.0
        %969 = vmatprep.subr.mxu0 0.0
        %970 = vmatpush1.msra.mxu0 0.0
        %971 = vmatprep.subr.mxu0 0.0
        %972 = vmatpush1.msra.mxu0 0.0
        %973 = vmatprep.subr.mxu0 0.0
        %974 = vmatpush1.msra.mxu0 0.0
        %975 = vmatprep.subr.mxu0 0.0
        %976 = vmatpush1.msra.mxu0 0.0
        %977 = vmatprep.subr.mxu0 0.0
        %978 = vmatpush1.msra.mxu0 0.0
        %979 = vmatprep.subr.mxu0 0.0
        %980 = vmatpush1.msra.mxu0 0.0
        %981 = vmatprep.subr.mxu0 0.0
        %982 = vmatpush1.msra.mxu0 0.0
        %983 = vmatprep.subr.mxu0 0.0
        %984 = vmatpush1.msra.mxu0 0.0
        %985 = vmatprep.subr.mxu0 0.0
        %986 = vmatpush1.msra.mxu0 0.0
        %987 = vmatprep.subr.mxu0 0.0
        %988 = vmatpush1.msra.mxu0 0.0
        %989 = vmatprep.subr.mxu0 0.0
        %990 = vmatpush1.msra.mxu0 0.0
        %991 = vmatprep.subr.mxu0 0.0
        %992 = vmatpush1.msra.mxu0 0.0
        %993 = vmatprep.subr.mxu0 0.0
        %994 = vmatpush1.msra.mxu0 0.0
        %995 = vmatprep.subr.mxu0 0.0
        %996 = vmatpush1.msra.mxu0 0.0
        %997 = vmatprep.subr.mxu0 0.0
        %998 = vmatpush1.msra.mxu0 0.0
        %999 = vmatprep.subr.mxu0 0.0
        %1000 = vmatpush1.msra.mxu0 0.0
        %1001 = vmatprep.subr.mxu0 0.0
        %1002 = vmatpush1.msra.mxu0 0.0
        %1003 = vmatprep.subr.mxu0 0.0
        %1004 = vmatpush1.msra.mxu0 0.0
        %1005 = vmatprep.subr.mxu0 0.0
        %1006 = vmatpush1.msra.mxu0 0.0
        %1007 = vmatprep.subr.mxu0 0.0
        %1008 = vmatpush1.msra.mxu0 0.0
        %1009 = vmatprep.subr.mxu0 0.0
        %1010 = vmatpush1.msra.mxu0 0.0
        %1011 = vmatprep.subr.mxu0 0.0
        %1012 = vmatpush1.msra.mxu0 0.0
        %1013 = vmatprep.subr.mxu0 0.0
        %1014 = vmatpush1.msra.mxu0 0.0
        %1015 = vmatprep.mubr.f32.mxu0 0.0
        %1016 = vmatmul.mubr.f32.gmra.mrb[0].mxu0 %v949
        %v1017 = vpop.f32.mrb[0].mxu0
        %v1018 = vadd.f32 0.0, %v1017
        %v1019 = vpop.f32.mrb[0].mxu0
        %1020 = vdwg.mxu0
        %v1022 = vsel %vm737, %v793, 0
        %1024 = vmatprep.subr.mxu0 0.0
        %1025 = vmatpush1.msra.mxu0 %v801
        %1026 = vmatprep.subr.mxu0 0.0
        %1027 = vmatpush1.msra.mxu0 0.0
        %1028 = vmatprep.subr.mxu0 0.0
        %1029 = vmatpush1.msra.mxu0 0.0
        %1030 = vmatprep.subr.mxu0 0.0
        %1031 = vmatpush1.msra.mxu0 0.0
        %1032 = vmatprep.subr.mxu0 0.0
        %1033 = vmatpush1.msra.mxu0 0.0
        %1034 = vmatprep.subr.mxu0 0.0
        %1035 = vmatpush1.msra.mxu0 0.0
        %1036 = vmatprep.subr.mxu0 0.0
        %1037 = vmatpush1.msra.mxu0 0.0
        %1038 = vmatprep.subr.mxu0 0.0
        %1039 = vmatpush1.msra.mxu0 0.0
        %1040 = vmatprep.subr.mxu0 0.0
        %1041 = vmatpush1.msra.mxu0 0.0
        %1042 = vmatprep.subr.mxu0 0.0
        %1043 = vmatpush1.msra.mxu0 0.0
        %1044 = vmatprep.subr.mxu0 0.0
        %1045 = vmatpush1.msra.mxu0 0.0
        %1046 = vmatprep.subr.mxu0 0.0
        %1047 = vmatpush1.msra.mxu0 0.0
        %1048 = vmatprep.subr.mxu0 0.0
        %1049 = vmatpush1.msra.mxu0 0.0
        %1050 = vmatprep.subr.mxu0 0.0
        %1051 = vmatpush1.msra.mxu0 0.0
        %1052 = vmatprep.subr.mxu0 0.0
        %1053 = vmatpush1.msra.mxu0 0.0
        %1054 = vmatprep.subr.mxu0 0.0
        %1055 = vmatpush1.msra.mxu0 0.0
        %1056 = vmatprep.subr.mxu0 0.0
        %1057 = vmatpush1.msra.mxu0 0.0
        %1058 = vmatprep.subr.mxu0 0.0
        %1059 = vmatpush1.msra.mxu0 0.0
        %1060 = vmatprep.subr.mxu0 0.0
        %1061 = vmatpush1.msra.mxu0 0.0
        %1062 = vmatprep.subr.mxu0 0.0
        %1063 = vmatpush1.msra.mxu0 0.0
        %1064 = vmatprep.subr.mxu0 0.0
        %1065 = vmatpush1.msra.mxu0 0.0
        %1066 = vmatprep.subr.mxu0 0.0
        %1067 = vmatpush1.msra.mxu0 0.0
        %1068 = vmatprep.subr.mxu0 0.0
        %1069 = vmatpush1.msra.mxu0 0.0
        %1070 = vmatprep.subr.mxu0 0.0
        %1071 = vmatpush1.msra.mxu0 0.0
        %1072 = vmatprep.subr.mxu0 0.0
        %1073 = vmatpush1.msra.mxu0 0.0
        %1074 = vmatprep.subr.mxu0 0.0
        %1075 = vmatpush1.msra.mxu0 0.0
        %1076 = vmatprep.subr.mxu0 0.0
        %1077 = vmatpush1.msra.mxu0 0.0
        %1078 = vmatprep.subr.mxu0 0.0
        %1079 = vmatpush1.msra.mxu0 0.0
        %1080 = vmatprep.subr.mxu0 0.0
        %1081 = vmatpush1.msra.mxu0 0.0
        %1082 = vmatprep.subr.mxu0 0.0
        %1083 = vmatpush1.msra.mxu0 0.0
        %1084 = vmatprep.subr.mxu0 0.0
        %1085 = vmatpush1.msra.mxu0 0.0
        %1086 = vmatprep.subr.mxu0 0.0
        %1087 = vmatpush1.msra.mxu0 0.0
        %1088 = vmatprep.mubr.f32.mxu0 0.0
        %1089 = vmatmul.mubr.f32.gmra.mrb[0].mxu0 %v1022
        %v1090 = vpop.f32.mrb[0].mxu0
        %v1091 = vadd.f32 0.0, %v1090
        %v1092 = vpop.f32.mrb[0].mxu0
        %1093 = vdwg.mxu0
        %1094 = vst.msk [vmem:[%s386] sm:$0xff] %vm414, %v872
        %1095 = vst.msk [vmem:[%s386 + $0x8] sm:$0xff] %vm414, %v945
        %1096 = vst.msk [vmem:[%s386 + $0x10] sm:$0xff] %vm414, %v1018
        %1097 = vst.msk [vmem:[%s386 + $0x18] sm:$0xff] %vm414, %v1091
        %s1098 = sand.u32 %s174, 1
        %s1099 = scalar_lea.sflag [#allocation4], %s1098
        %s1100 = sand.u32 %s174, 1
        %s1101 = smul.addr %s1100, 32
        %s1102 = scalar_lea.vmem [#allocation8], %s1101
        %s1103 = sand.u32 %s204, 1
        %s1104 = scalar_lea.sflag [#allocation10], %s1103
        %s1105 = sand.u32 %s204, 1
        %s1106 = smul.addr %s1105, 32
        %s1107 = scalar_lea.vmem [#allocation9], %s1106
        // Predicated region
        $region49: #{tpu_custom_call.1} parent=35 // pred_check
          %p1108 = pneg %p184
        $region50: #{tpu_custom_call.1} parent=35 // pred_check_branch
          %1110 = sbr.rel (%p1108) target = $region52
        $region51: #{tpu_custom_call.1} parent=35 // pred_region
          %s1111 = smul.u32 4, %s35
          %s1113 = ssub.s32 512, 512
          %1114 = vsyncadd %s1099, %s1113
          %s1115 = sadd.s32 %s36, %s1111
          %s1116 = smul.addr %s34, 4
          %s1117 = sadd.s32 %s1115, %s1116
          %s1118 = smul.addr %s1117, 128
          %s1119 = scalar_lea.hbm %s4, %s1118
          %s1120 = sshll.u32 %s1102, 4
          %s1121 = int_to_ptr.vmem [resolvable:$true] %s1120
          %1126 = dma.vmem_to_hbm [thread:$0]  %s1121, 512, %s1119, %s1099, 128, 128, 8
        $region52: #{tpu_custom_call.1} parent=35 // pred_fallthru
          _
        // Predicated region
        $region53: #{tpu_custom_call.1} parent=35 // pred_check
          %p1127 = pneg %p214
        $region54: #{tpu_custom_call.1} parent=35 // pred_check_branch
          %1129 = sbr.rel (%p1127) target = $region56
        $region55: #{tpu_custom_call.1} parent=35 // pred_region
          %s1130 = smul.u32 4, %s35
          %s1132 = ssub.s32 512, 512
          %1133 = vsyncadd %s1104, %s1132
          %s1134 = sadd.s32 %s36, %s1130
          %s1135 = smul.addr %s34, 4
          %s1136 = sadd.s32 %s1134, %s1135
          %s1137 = smul.addr %s1136, 128
          %s1138 = scalar_lea.hbm %s5, %s1137
          %s1139 = sshll.u32 %s1107, 4
          %s1140 = int_to_ptr.vmem [resolvable:$true] %s1139
          %1145 = dma.vmem_to_hbm [thread:$0]  %s1140, 512, %s1138, %s1104, 128, 128, 8
        $region56: #{tpu_custom_call.1} parent=35 // pred_fallthru
          _
      $region36: #{tpu_custom_call.1} parent=5 // pred_fallthru
        _
      %p1146 = scmp.le.s32.totalorder 2, %s24
      // Predicated region
      $region57: #{tpu_custom_call.1} parent=5 // pred_check
        %p1147 = pneg %p1146
      $region58: #{tpu_custom_call.1} parent=5 // pred_check_branch
        %1149 = sbr.rel (%p1147) target = $region60
      $region59: #{tpu_custom_call.1} parent=5 // pred_region
        %s1150 = ssub.s32 %s24, 2
        // Predicated region
        $region61: #{tpu_custom_call.1} parent=59 // pred_check
          %p1151 = pneg %p190
        $region62: #{tpu_custom_call.1} parent=59 // pred_check_branch
          %1153 = sbr.rel (%p1151) target = $region64
        $region63: #{tpu_custom_call.1} parent=59 // pred_region
          %s1154 = sand.u32 %s175, 1
          %s1155 = scalar_lea.sflag [#allocation4], %s1154
          %s1156 = sand.u32 %s175, 1
          %s1157 = smul.addr %s1156, 32
          %s1158 = scalar_lea.vmem [#allocation8], %s1157
          %1159 = dma.done %s1155, 512
        $region64: #{tpu_custom_call.1} parent=59 // pred_fallthru
          _
        // Predicated region
        $region65: #{tpu_custom_call.1} parent=59 // pred_check
          %p1160 = pneg %p220
        $region66: #{tpu_custom_call.1} parent=59 // pred_check_branch
          %1162 = sbr.rel (%p1160) target = $region68
        $region67: #{tpu_custom_call.1} parent=59 // pred_region
          %s1163 = sand.u32 %s205, 1
          %s1164 = scalar_lea.sflag [#allocation10], %s1163
          %s1165 = sand.u32 %s205, 1
          %s1166 = smul.addr %s1165, 32
          %s1167 = scalar_lea.vmem [#allocation9], %s1166
          %1168 = dma.done %s1164, 512
        $region68: #{tpu_custom_call.1} parent=59 // pred_fallthru
          _
      $region60: #{tpu_custom_call.1} parent=5 // pred_fallthru
        _
    $region6: #{tpu_custom_call.1} parent=1 // loop_footer
      %s28 = sadd.s32 1, %s24
    $region7: #{tpu_custom_call.1} parent=1 // loop_footer_branch
      %23 = sbr.rel target = $region3
    $region8: #{tpu_custom_call.1} parent=1 // loop_exit
      _
    %1169 = vsyncpa [#allocation3], 1
    %s1170 = scalar_lea.sflag [#allocation3], 1
    %1171 = vsyncpa %s1170, 1
    %1172 = vsyncpa [#allocation6], 1
    %s1173 = scalar_lea.sflag [#allocation6], 1
    %1174 = vsyncpa %s1173, 1
    %1175 = vsyncpa [#allocation4], 1
    %s1176 = scalar_lea.sflag [#allocation4], 1
    %1177 = vsyncpa %s1176, 1
    %1178 = vsyncpa [#allocation10], 1
    %s1179 = scalar_lea.sflag [#allocation10], 1
    %1180 = vsyncpa %s1179, 1

</llo_original>
